<compile_context>
chip_gen: v7x
topology: tpu7x:2x2x1
jax: 0.10.0
libtpu: 0.0.40
codegen_flags: <defaults>
</compile_context>

<pallas_src>
import jax
import jax.numpy as jnp
from jax.experimental import pallas as pl
from jax.experimental.pallas import tpu as pltpu

# ---- static model config --------------------------------------------------------------
F_ATOM = 16                    # num_atom_features
EMB = 32                       # emb_dim
FC0, FC1 = 32, 16              # fully_connected_layer_sizes
AUXR = 8                       # f32 aux rows: 0=scale[Z], 1=shift[Z], 2=u=scale*b_fc2+shift
NBIAS = 8                      # f32 bias columns
OUT_SUB, OUTW = 8, 128         # lane-dense output tile per block

# ---- blocking (graphs never span a block) ---------------------------------------------
NPG = 32                       # nodes per (padded) molecule
GPB = 4                        # graphs per grid block
NB = GPB * NPG                 # 128 nodes per block -> full 128-lane tiles

# wpack row layout ([WROWS, EMB] bf16): transposed weights at 8/16-row aligned offsets
R_WX, R_WG0, R_WG1, R_WFC0, R_WFC1, R_W2 = 0, 32, 64, 96, 128, 144
WROWS = 160
# bpack column layout ([EMB, NBIAS] f32)
C_BX, C_BG0, C_BG1, C_BFC0, C_BFC1 = 0, 1, 2, 3, 4


def gnn1_kernel(feat_ref, aux_ref, adj_ref, wp_ref, bp_ref, seg_ref, out_ref):
    f32, bf16 = jnp.float32, jnp.bfloat16
    dotf = lambda a, b: jnp.dot(a.astype(bf16), b.astype(bf16), preferred_element_type=f32)

    adj = adj_ref[...]            # [NB, NB] bf16 symmetric block-diag normalized adjacency
    seg = seg_ref[...]            # [NB, OUTW] bf16 node->graph one-hot columns (cols >= GPB zero)
    bp = bp_ref[...]              # [EMB, NBIAS] f32 bias columns

    s_row = aux_ref[0:1, :]       # [1, NB] scale[Z]
    t_row = aux_ref[1:2, :]       # [1, NB] shift[Z]
    u_row = aux_ref[2:3, :]       # [1, NB] scale[Z]*b_fc2 + shift[Z]

    # aligned, ref-sliced transposed weights (bf16)
    wxT = wp_ref[R_WX:R_WX + EMB, :]
    wg0T = wp_ref[R_WG0:R_WG0 + EMB, :]
    wg1T = wp_ref[R_WG1:R_WG1 + EMB, :]
    wf0T = wp_ref[R_WFC0:R_WFC0 + FC0, :]
    wf1T = wp_ref[R_WFC1:R_WFC1 + FC1, :]
    w2r = wp_ref[R_W2:R_W2 + 1, :]

    # node embedding: H = Wx^T X + b_x   (feature-major [EMB, NB])
    h = dotf(wxT, feat_ref[...]) + bp[:, C_BX:C_BX + 1]

    # GCN layer 0: H <- Wg0^T H A + bg0 + H (residual); ReLU
    h = dotf(dotf(wg0T, h), adj) + bp[:, C_BG0:C_BG0 + 1] + h
    h = jnp.maximum(h, 0.0)

    # GCN layer 1 (last layer: residual, no activation; dropout p=0 is identity)
    h = dotf(dotf(wg1T, h), adj) + bp[:, C_BG1:C_BG1 + 1] + h

    # FC head; after every layer MolEmbed = scale[Z]*MolEmbed + shift[Z]
    m = jnp.maximum(dotf(wf0T, h) + bp[:, C_BFC0:C_BFC0 + 1], 0.0)       # [FC0, NB]
    m = s_row * m + t_row
    m = jnp.maximum(dotf(wf1T, m) + bp[:FC1, C_BFC1:C_BFC1 + 1], 0.0)    # [FC1, NB]
    m = s_row * m + t_row
    # last Linear([FC1,1]) + final scale/shift folded: e = s*(w_fc2 . m) + (s*b_fc2 + t)
    e_row = s_row * dotf(w2r[:, :FC1], m) + u_row                        # [1, NB]

    # global_add_pool per graph; row-replicate so the store is a full unmasked (8,128) tile
    e_rep = jnp.broadcast_to(e_row, (OUT_SUB, e_row.shape[1]))
    out_ref[...] = dotf(e_rep, seg)                                      # [OUT_SUB, OUTW]


def gnn1_forward(featp, aux, adj_blocks, wpack, bpack, segw):
    nblk, nb, _ = adj_blocks.shape
    return pl.pallas_call(
        gnn1_kernel,
        grid=(nblk,),
        in_specs=[
            pl.BlockSpec((featp.shape[0], nb), lambda b: (0, b)),   # features, feature-major
            pl.BlockSpec((aux.shape[0], nb), lambda b: (0, b)),     # scale/shift/u rows (f32)
            pl.BlockSpec((None, nb, nb), lambda b: (b, 0, 0)),      # block-diag adjacency (bf16)
            pl.BlockSpec(wpack.shape, lambda b: (0, 0)),            # weights, resident
            pl.BlockSpec(bpack.shape, lambda b: (0, 0)),            # bias columns, resident
            pl.BlockSpec(segw.shape, lambda b: (0, 0)),             # node->graph one-hots, resident
        ],
        out_specs=pl.BlockSpec((None, OUT_SUB, OUTW), lambda b: (b, 0, 0)),
        out_shape=jax.ShapeDtypeStruct((nblk, OUT_SUB, OUTW), jnp.float32),
        compiler_params=pltpu.CompilerParams(
            dimension_semantics=("parallel",)),                     # graph blocks are independent
    )(featp, aux, adj_blocks, wpack, bpack, segw)


def reference_forward(x, adj, params, scale_n, shift_n, pool, mirror_bf16=True):
    """Pure-JAX reference of the PyTorch GNN_1 forward. mirror_bf16=True mirrors the kernel's
    bf16-operand / f32-accumulate matmuls (tight check); False is a full-f32 reference used
    as a looser sanity check of the overall bf16 numerics."""
    f32, bf16 = jnp.float32, jnp.bfloat16
    if mirror_bf16:
        dot = lambda a, b: jnp.dot(a.astype(bf16), b.astype(bf16), preferred_element_type=f32)
    else:
        dot = lambda a, b: jnp.dot(a, b, precision=jax.lax.Precision.HIGHEST)
    sc, sh = scale_n[:, None], shift_n[:, None]

    h = dot(x, params['w_x']) + params['b_x']
    res = h
    h = dot(adj, dot(h, params['wg0'])) + params['bg0'] + res
    h = jnp.maximum(h, 0.0)
    res = h
    h = dot(adj, dot(h, params['wg1'])) + params['bg1'] + res

    m = jnp.maximum(dot(h, params['w_fc0']) + params['b_fc0'], 0.0)
    m = sc * m + sh
    m = jnp.maximum(dot(m, params['w_fc1']) + params['b_fc1'], 0.0)
    m = sc * m + sh
    m = dot(m, params['w_fc2']) + params['b_fc2']
    m = sc * m + sh
    return dot(pool, m).reshape(-1)


if __name__ == "__main__":
    G = 16                          # graphs in the batch
    N = G * NPG                     # 512 total nodes
    NBLK = G // GPB                 # 4 grid blocks (multiple of 2 for v7x's two TCs)
    assert G % GPB == 0

    key = jax.random.PRNGKey(0)
    keys = jax.random.split(key, 14)

    # Node features and atomic numbers Z (< emb_dim so scale[Z] indexing is valid).
    x = jax.random.normal(keys[0], (N, F_ATOM), dtype=jnp.float32)
    Z = jax.random.randint(keys[1], (N,), 0, EMB)

    # Deterministic ring graph per molecule; dense symmetrically-normalized adjacency + self loops.
    idx = jnp.arange(N)
    nxt = (idx % NPG + 1) % NPG + (idx // NPG) * NPG
    A = jnp.zeros((N, N), jnp.float32).at[idx, nxt].set(1.0).at[nxt, idx].set(1.0)
    A = A + jnp.eye(N, dtype=jnp.float32)
    dinv = 1.0 / jnp.sqrt(A.sum(axis=1))
    adj = dinv[:, None] * A * dinv[None, :]
    batch = idx // NPG

    def init(k, shape, scl=0.1):
        return scl * jax.random.normal(k, shape, dtype=jnp.float32)

    params = {
        'w_x': init(keys[2], (F_ATOM, EMB)),  'b_x': init(keys[3], (1, EMB)),
        'wg0': init(keys[4], (EMB, EMB)),     'bg0': init(keys[5], (1, EMB)),
        'wg1': init(keys[6], (EMB, EMB)),     'bg1': init(keys[7], (1, EMB)),
        'w_fc0': init(keys[8], (EMB, FC0)),   'b_fc0': init(keys[9], (1, FC0)),
        'w_fc1': init(keys[10], (FC0, FC1)),  'b_fc1': init(keys[11], (1, FC1)),
        'w_fc2': init(keys[12], (FC1, 1)),    'b_fc2': init(keys[13], (1, 1)),
    }

    # scale / shift parameters: [emb_dim, 1] filled with energy_scale / energy_shift.
    energy_scale, energy_shift = 2.0, 0.1
    scale = jnp.full((EMB, 1), energy_scale, dtype=jnp.float32)
    shift = jnp.full((EMB, 1), energy_shift, dtype=jnp.float32)
    scale_n = scale[Z, 0]                                   # [N]
    shift_n = shift[Z, 0]                                   # [N]
    u_n = scale_n * params['b_fc2'][0, 0] + shift_n         # folded last-layer constant

    # ---- pack kernel operands (feature-major) ------------------------------------------
    featp = (jnp.zeros((EMB, N), jnp.float32).at[:F_ATOM, :].set(x.T)).astype(jnp.bfloat16)
    aux = (jnp.zeros((AUXR, N), jnp.float32)
           .at[0].set(scale_n).at[1].set(shift_n).at[2].set(u_n))

    # graphs never span a block -> block-diagonal slices are exact; bf16 for the MXU.
    adj_blocks = jnp.stack(
        [adj[b * NB:(b + 1) * NB, b * NB:(b + 1) * NB] for b in range(NBLK)]
    ).astype(jnp.bfloat16)

    wxT = jnp.zeros((EMB, EMB), jnp.float32).at[:, :F_ATOM].set(params['w_x'].T)
    w2row = jnp.zeros((1, EMB), jnp.float32).at[0, :FC1].set(params['w_fc2'][:, 0])
    wpack = (jnp.zeros((WROWS, EMB), jnp.float32)
             .at[R_WX:R_WX + EMB].set(wxT)
             .at[R_WG0:R_WG0 + EMB].set(params['wg0'].T)
             .at[R_WG1:R_WG1 + EMB].set(params['wg1'].T)
             .at[R_WFC0:R_WFC0 + FC0].set(params['w_fc0'].T)
             .at[R_WFC1:R_WFC1 + FC1].set(params['w_fc1'].T)
             .at[R_W2:R_W2 + 1].set(w2row)).astype(jnp.bfloat16)

    bpack = (jnp.zeros((EMB, NBIAS), jnp.float32)
             .at[:, C_BX].set(params['b_x'][0])
             .at[:, C_BG0].set(params['bg0'][0])
             .at[:, C_BG1].set(params['bg1'][0])
             .at[:, C_BFC0].set(params['b_fc0'][0])
             .at[:FC1, C_BFC1].set(params['b_fc1'][0]))

    # node->graph one-hot columns, identical for every block (bf16, exact 0/1).
    segw = ((jnp.arange(NB) // NPG)[:, None] == jnp.arange(OUTW)[None, :]).astype(jnp.bfloat16)

    out_tiles = gnn1_forward(featp, aux, adj_blocks, wpack, bpack, segw)
    out_tiles = jax.block_until_ready(out_tiles)
    out = out_tiles[:, 0, :GPB].reshape(-1)                 # .view(-1) in the PyTorch module

    # ---- checks -------------------------------------------------------------------------
    pool = (batch[None, :] == jnp.arange(G)[:, None]).astype(jnp.float32)   # [G, N]
    ref_mirror = reference_forward(x, adj, params, scale_n, shift_n, pool, mirror_bf16=True)
    ref_f32 = reference_forward(x, adj, params, scale_n, shift_n, pool, mirror_bf16=False)

    assert out.shape == (G,)
    assert jnp.allclose(out, ref_mirror, rtol=1e-2, atol=1e-2), (out, ref_mirror)
    rel = jnp.max(jnp.abs(out - ref_f32)) / jnp.maximum(1.0, jnp.max(jnp.abs(ref_f32)))
    assert rel < 0.1, (out, ref_f32, rel)    # loose sanity check vs a true-f32 reference

    print("KERNEL_OK")
</pallas_src>

<mosaic_0001>
module attributes {stable_mosaic.version = 11 : i64} {
  func.func @gnn1_kernel(%arg0: i32, %arg1: memref<32x128xbf16, #tpu.memory_space<vmem>>, %arg2: memref<8x128xf32, #tpu.memory_space<vmem>>, %arg3: memref<1x128x128xbf16, #tpu.memory_space<vmem>>, %arg4: memref<160x32xbf16, #tpu.memory_space<vmem>>, %arg5: memref<32x8xf32, #tpu.memory_space<vmem>>, %arg6: memref<128x128xbf16, #tpu.memory_space<vmem>>, %arg7: memref<1x8x128xf32, #tpu.memory_space<vmem>>) attributes {dimension_semantics = [#tpu.dimension_semantics<parallel>], iteration_bounds = array<i64: 4>, scalar_prefetch = 0 : i64, scratch_operands = 0 : i64, tpu.core_type = #tpu.core_type<tc>, window_params = [{transform_indices = @transform_0, window_bounds = array<i64: 32, 128>}, {transform_indices = @transform_1, window_bounds = array<i64: 8, 128>}, {transform_indices = @transform_2, window_bounds = array<i64: 1, 128, 128>}, {pipeline_mode = #tpu.pipeline_mode<synchronous>, transform_indices = @transform_3, window_bounds = array<i64: 160, 32>}, {pipeline_mode = #tpu.pipeline_mode<synchronous>, transform_indices = @transform_4, window_bounds = array<i64: 32, 8>}, {pipeline_mode = #tpu.pipeline_mode<synchronous>, transform_indices = @transform_5, window_bounds = array<i64: 128, 128>}, {transform_indices = @transform_6, window_bounds = array<i64: 1, 8, 128>}]} {
    %c0 = arith.constant 0 : index
    %c0_0 = arith.constant 0 : index
    %c0_1 = arith.constant 0 : index
    %0 = vector.load %arg3[%c0, %c0_0, %c0_1] : memref<1x128x128xbf16, #tpu.memory_space<vmem>>, vector<1x128x128xbf16>
    %1 = vector.shape_cast %0 : vector<1x128x128xbf16> to vector<128x128xbf16>
    %c0_2 = arith.constant 0 : index
    %c0_3 = arith.constant 0 : index
    %2 = vector.load %arg6[%c0_2, %c0_3] : memref<128x128xbf16, #tpu.memory_space<vmem>>, vector<128x128xbf16>
    %c0_4 = arith.constant 0 : index
    %c0_5 = arith.constant 0 : index
    %3 = vector.load %arg5[%c0_4, %c0_5] : memref<32x8xf32, #tpu.memory_space<vmem>>, vector<32x8xf32>
    %c0_6 = arith.constant 0 : index
    %c0_7 = arith.constant 0 : index
    %4 = vector.load %arg2[%c0_6, %c0_7] : memref<8x128xf32, #tpu.memory_space<vmem>>, vector<1x128xf32>
    %c1 = arith.constant 1 : index
    %c0_8 = arith.constant 0 : index
    %5 = vector.load %arg2[%c1, %c0_8] : memref<8x128xf32, #tpu.memory_space<vmem>>, vector<1x128xf32>
    %c2 = arith.constant 2 : index
    %c0_9 = arith.constant 0 : index
    %6 = vector.load %arg2[%c2, %c0_9] : memref<8x128xf32, #tpu.memory_space<vmem>>, vector<1x128xf32>
    %c0_10 = arith.constant 0 : index
    %c0_11 = arith.constant 0 : index
    %7 = vector.load %arg4[%c0_10, %c0_11] : memref<160x32xbf16, #tpu.memory_space<vmem>>, vector<32x32xbf16>
    %c32 = arith.constant 32 : index
    %c0_12 = arith.constant 0 : index
    %8 = vector.load %arg4[%c32, %c0_12] : memref<160x32xbf16, #tpu.memory_space<vmem>>, vector<32x32xbf16>
    %c64 = arith.constant 64 : index
    %c0_13 = arith.constant 0 : index
    %9 = vector.load %arg4[%c64, %c0_13] : memref<160x32xbf16, #tpu.memory_space<vmem>>, vector<32x32xbf16>
    %c96 = arith.constant 96 : index
    %c0_14 = arith.constant 0 : index
    %10 = vector.load %arg4[%c96, %c0_14] : memref<160x32xbf16, #tpu.memory_space<vmem>>, vector<32x32xbf16>
    %c128 = arith.constant 128 : index
    %c0_15 = arith.constant 0 : index
    %11 = vector.load %arg4[%c128, %c0_15] : memref<160x32xbf16, #tpu.memory_space<vmem>>, vector<16x32xbf16>
    %c144 = arith.constant 144 : index
    %c0_16 = arith.constant 0 : index
    %12 = vector.load %arg4[%c144, %c0_16] : memref<160x32xbf16, #tpu.memory_space<vmem>>, vector<1x32xbf16>
    %c0_17 = arith.constant 0 : index
    %c0_18 = arith.constant 0 : index
    %13 = vector.load %arg1[%c0_17, %c0_18] : memref<32x128xbf16, #tpu.memory_space<vmem>>, vector<32x128xbf16>
    %cst = arith.constant dense<0.000000e+00> : vector<32x128xf32>
    %14 = tpu.matmul %7, %13, %cst {dimension_numbers = #tpu.dot_dimension_numbers<[1], [0], [0], [1], [0, 0, 1, 1], [], []>} : vector<32x32xbf16>, vector<32x128xbf16>, vector<32x128xf32> -> vector<32x128xf32>
    %15 = vector.extract_strided_slice %3 {offsets = [0, 0], sizes = [32, 1], strides = [1, 1]} : vector<32x8xf32> to vector<32x1xf32>
    %16 = vector.broadcast %15 : vector<32x1xf32> to vector<32x128xf32>
    %17 = arith.addf %14, %16 : vector<32x128xf32>
    %18 = arith.truncf %17 : vector<32x128xf32> to vector<32x128xbf16>
    %cst_19 = arith.constant dense<0.000000e+00> : vector<32x128xf32>
    %19 = tpu.matmul %8, %18, %cst_19 {dimension_numbers = #tpu.dot_dimension_numbers<[1], [0], [0], [1], [0, 0, 1, 1], [], []>} : vector<32x32xbf16>, vector<32x128xbf16>, vector<32x128xf32> -> vector<32x128xf32>
    %20 = arith.truncf %19 : vector<32x128xf32> to vector<32x128xbf16>
    %cst_20 = arith.constant dense<0.000000e+00> : vector<32x128xf32>
    %21 = tpu.matmul %20, %1, %cst_20 {dimension_numbers = #tpu.dot_dimension_numbers<[1], [0], [0], [1], [0, 0, 1, 1], [], []>} : vector<32x128xbf16>, vector<128x128xbf16>, vector<32x128xf32> -> vector<32x128xf32>
    %22 = vector.extract_strided_slice %3 {offsets = [0, 1], sizes = [32, 1], strides = [1, 1]} : vector<32x8xf32> to vector<32x1xf32>
    %23 = vector.broadcast %22 : vector<32x1xf32> to vector<32x128xf32>
    %24 = arith.addf %21, %23 : vector<32x128xf32>
    %25 = arith.addf %24, %17 : vector<32x128xf32>
    %cst_21 = arith.constant 0.000000e+00 : f32
    %26 = vector.broadcast %cst_21 : f32 to vector<32x128xf32>
    %27 = arith.maximumf %25, %26 : vector<32x128xf32>
    %28 = arith.truncf %27 : vector<32x128xf32> to vector<32x128xbf16>
    %cst_22 = arith.constant dense<0.000000e+00> : vector<32x128xf32>
    %29 = tpu.matmul %9, %28, %cst_22 {dimension_numbers = #tpu.dot_dimension_numbers<[1], [0], [0], [1], [0, 0, 1, 1], [], []>} : vector<32x32xbf16>, vector<32x128xbf16>, vector<32x128xf32> -> vector<32x128xf32>
    %30 = arith.truncf %29 : vector<32x128xf32> to vector<32x128xbf16>
    %cst_23 = arith.constant dense<0.000000e+00> : vector<32x128xf32>
    %31 = tpu.matmul %30, %1, %cst_23 {dimension_numbers = #tpu.dot_dimension_numbers<[1], [0], [0], [1], [0, 0, 1, 1], [], []>} : vector<32x128xbf16>, vector<128x128xbf16>, vector<32x128xf32> -> vector<32x128xf32>
    %32 = vector.extract_strided_slice %3 {offsets = [0, 2], sizes = [32, 1], strides = [1, 1]} : vector<32x8xf32> to vector<32x1xf32>
    %33 = vector.broadcast %32 : vector<32x1xf32> to vector<32x128xf32>
    %34 = arith.addf %31, %33 : vector<32x128xf32>
    %35 = arith.addf %34, %27 : vector<32x128xf32>
    %36 = arith.truncf %35 : vector<32x128xf32> to vector<32x128xbf16>
    %cst_24 = arith.constant dense<0.000000e+00> : vector<32x128xf32>
    %37 = tpu.matmul %10, %36, %cst_24 {dimension_numbers = #tpu.dot_dimension_numbers<[1], [0], [0], [1], [0, 0, 1, 1], [], []>} : vector<32x32xbf16>, vector<32x128xbf16>, vector<32x128xf32> -> vector<32x128xf32>
    %38 = vector.extract_strided_slice %3 {offsets = [0, 3], sizes = [32, 1], strides = [1, 1]} : vector<32x8xf32> to vector<32x1xf32>
    %39 = vector.broadcast %38 : vector<32x1xf32> to vector<32x128xf32>
    %40 = arith.addf %37, %39 : vector<32x128xf32>
    %cst_25 = arith.constant 0.000000e+00 : f32
    %41 = vector.broadcast %cst_25 : f32 to vector<32x128xf32>
    %42 = arith.maximumf %40, %41 : vector<32x128xf32>
    %43 = vector.broadcast %4 : vector<1x128xf32> to vector<32x128xf32>
    %44 = arith.mulf %43, %42 : vector<32x128xf32>
    %45 = vector.broadcast %5 : vector<1x128xf32> to vector<32x128xf32>
    %46 = arith.addf %44, %45 : vector<32x128xf32>
    %47 = arith.truncf %46 : vector<32x128xf32> to vector<32x128xbf16>
    %cst_26 = arith.constant dense<0.000000e+00> : vector<16x128xf32>
    %48 = tpu.matmul %11, %47, %cst_26 {dimension_numbers = #tpu.dot_dimension_numbers<[1], [0], [0], [1], [0, 0, 1, 1], [], []>} : vector<16x32xbf16>, vector<32x128xbf16>, vector<16x128xf32> -> vector<16x128xf32>
    %49 = vector.extract_strided_slice %3 {offsets = [0, 4], sizes = [16, 1], strides = [1, 1]} : vector<32x8xf32> to vector<16x1xf32>
    %50 = vector.broadcast %49 : vector<16x1xf32> to vector<16x128xf32>
    %51 = arith.addf %48, %50 : vector<16x128xf32>
    %cst_27 = arith.constant 0.000000e+00 : f32
    %52 = vector.broadcast %cst_27 : f32 to vector<16x128xf32>
    %53 = arith.maximumf %51, %52 : vector<16x128xf32>
    %54 = vector.broadcast %4 : vector<1x128xf32> to vector<16x128xf32>
    %55 = arith.mulf %54, %53 : vector<16x128xf32>
    %56 = vector.broadcast %5 : vector<1x128xf32> to vector<16x128xf32>
    %57 = arith.addf %55, %56 : vector<16x128xf32>
    %58 = vector.extract_strided_slice %12 {offsets = [0, 0], sizes = [1, 16], strides = [1, 1]} : vector<1x32xbf16> to vector<1x16xbf16>
    %59 = arith.truncf %57 : vector<16x128xf32> to vector<16x128xbf16>
    %cst_28 = arith.constant dense<0.000000e+00> : vector<1x128xf32>
    %60 = tpu.matmul %58, %59, %cst_28 {dimension_numbers = #tpu.dot_dimension_numbers<[1], [0], [0], [1], [0, 0, 1, 1], [], []>} : vector<1x16xbf16>, vector<16x128xbf16>, vector<1x128xf32> -> vector<1x128xf32>
    %61 = arith.mulf %4, %60 : vector<1x128xf32>
    %62 = arith.addf %61, %6 : vector<1x128xf32>
    %63 = vector.shape_cast %62 : vector<1x128xf32> to vector<1x128xf32>
    %64 = vector.broadcast %63 : vector<1x128xf32> to vector<8x128xf32>
    %65 = arith.truncf %64 : vector<8x128xf32> to vector<8x128xbf16>
    %cst_29 = arith.constant dense<0.000000e+00> : vector<8x128xf32>
    %66 = tpu.matmul %65, %2, %cst_29 {dimension_numbers = #tpu.dot_dimension_numbers<[1], [0], [0], [1], [0, 0, 1, 1], [], []>} : vector<8x128xbf16>, vector<128x128xbf16>, vector<8x128xf32> -> vector<8x128xf32>
    %c0_30 = arith.constant 0 : index
    %c0_31 = arith.constant 0 : index
    %c0_32 = arith.constant 0 : index
    %67 = vector.load %arg7[%c0_30, %c0_31, %c0_32] : memref<1x8x128xf32, #tpu.memory_space<vmem>>, vector<1x8x128xf32>
    %68 = vector.shape_cast %67 : vector<1x8x128xf32> to vector<8x128xf32>
    %69 = vector.shape_cast %66 : vector<8x128xf32> to vector<1x8x128xf32>
    tpu.vector_store %arg7[%c0_30, %c0_31, %c0_32], %69 {strides = array<i32>} : memref<1x8x128xf32, #tpu.memory_space<vmem>>, vector<1x8x128xf32>,
    return
  }
  func.func @transform_0(%arg0: i32) -> (i32, i32) {
    %c0_i32 = arith.constant 0 : i32
    %c0_i32_0 = arith.constant 0 : i32
    return %c0_i32, %arg0 : i32, i32
  }
  func.func @transform_1(%arg0: i32) -> (i32, i32) {
    %c0_i32 = arith.constant 0 : i32
    %c0_i32_0 = arith.constant 0 : i32
    return %c0_i32, %arg0 : i32, i32
  }
  func.func @transform_2(%arg0: i32) -> (i32, i32, i32) {
    %c0_i32 = arith.constant 0 : i32
    %c0_i32_0 = arith.constant 0 : i32
    %c0_i32_1 = arith.constant 0 : i32
    return %arg0, %c0_i32, %c0_i32_0 : i32, i32, i32
  }
  func.func @transform_3(%arg0: i32) -> (i32, i32) {
    %c0_i32 = arith.constant 0 : i32
    %c0_i32_0 = arith.constant 0 : i32
    %c0_i32_1 = arith.constant 0 : i32
    return %c0_i32, %c0_i32_0 : i32, i32
  }
  func.func @transform_4(%arg0: i32) -> (i32, i32) {
    %c0_i32 = arith.constant 0 : i32
    %c0_i32_0 = arith.constant 0 : i32
    %c0_i32_1 = arith.constant 0 : i32
    return %c0_i32, %c0_i32_0 : i32, i32
  }
  func.func @transform_5(%arg0: i32) -> (i32, i32) {
    %c0_i32 = arith.constant 0 : i32
    %c0_i32_0 = arith.constant 0 : i32
    %c0_i32_1 = arith.constant 0 : i32
    return %c0_i32, %c0_i32_0 : i32, i32
  }
  func.func @transform_6(%arg0: i32) -> (i32, i32, i32) {
    %c0_i32 = arith.constant 0 : i32
    %c0_i32_0 = arith.constant 0 : i32
    %c0_i32_1 = arith.constant 0 : i32
    return %arg0, %c0_i32, %c0_i32_0 : i32, i32, i32
  }
}

</mosaic_0001>

<llo_original>
// kernel: tpu_custom_call.1
$region0: #{tpu_custom_call.1}
  #allocation0 [shape = 'u32[]', space=smem, size = 0x4, offset = 0x4, fixed_abs, tag = 'smem constant byte address 0x4 - core index']
  #allocation1 [shape = 'u32[144,128]{1,0:T(1,128)}', space=vmem, size = 0x12000, scoped, tag = 'internal scratch']
  %s0 = inlined_call_operand.vmem [shape: bf16[32,512], index: 0, kind: input, shape index: {}]
  %s1 = inlined_call_operand.hbm [shape: f32[8,512], index: 1, kind: input, shape index: {}]
  %s2 = inlined_call_operand.hbm [shape: bf16[4,128,128], index: 2, kind: input, shape index: {}]
  %s3 = inlined_call_operand.vmem [shape: bf16[160,32], index: 3, kind: input, shape index: {}]
  %s4 = inlined_call_operand.vmem [shape: f32[32,8], index: 4, kind: input, shape index: {}]
  %s5 = inlined_call_operand.vmem [shape: bf16[128,128], index: 5, kind: input, shape index: {}]
  %s6 = inlined_call_operand.hbm [shape: f32[4,8,128], index: 6, kind: output, shape index: {}]
  %s7 = sld [smem:[#allocation0]]
  $region106: #{tpu_custom_call.1} parent=0
    _
  %s9 = ssub.s32 1, %s7
  %s10 = scalar_select 0, %s9, %s7
  $region1: #{tpu_custom_call.1} parent=0
    #allocation2 [shape = 'u8[16384]{0}', space=vmem, size = 0x4000, scoped, tag = 'input window, operand 0']
    #allocation3 [shape = 'u8[8192]{0}', space=vmem, size = 0x2000, scoped, tag = 'input window, operand 1']
    #allocation4 [shape = 's32[2]{0}', space=sflag, size = 0x8, scoped, tag = 'scoped memory for tpu_custom_call.1']
    #allocation5 [shape = 's32[2]{0}', space=sflag, size = 0x8, scoped, tag = 'scoped memory for tpu_custom_call.1']
    #allocation6 [shape = 'u8[65536]{0}', space=vmem, size = 0x10000, scoped, tag = 'input window, operand 2']
    #allocation7 [shape = 's32[2]{0}', space=sflag, size = 0x8, scoped, tag = 'scoped memory for tpu_custom_call.1']
    #allocation8 [shape = 'u8[8192]{0}', space=vmem, size = 0x2000, scoped, tag = 'output window, operand 0']
    %11 = vsyncpa [#allocation4], 0
    %s12 = scalar_lea.sflag [#allocation4], 1
    %13 = vsyncpa %s12, 0
    %14 = vsyncpa [#allocation7], 0
    %s15 = scalar_lea.sflag [#allocation7], 1
    %16 = vsyncpa %s15, 0
    %17 = vsyncpa [#allocation5], 0
    %s18 = scalar_lea.sflag [#allocation5], 1
    %19 = vsyncpa %s18, 0
    loop: start=0, step=1, limit=6
    $region2: #{tpu_custom_call.1} parent=1 // loop_pre_header
      _
    $region3: #{tpu_custom_call.1} parent=1 // loop_header
      %s21 = sphi 0, %s25
      %p22 = scmp.ge.s32.totalorder %s21, 6
      %s31 = sphi 0, %s33
      %s34 = sphi 0, %s31
      %s35 = sphi 0, %s34
      %s51 = sphi 0, %s35
      %s57 = sphi 0, %s59
      %s60 = sphi 0, %s57
      %s61 = sphi 0, %s60
      %s77 = sphi 0, %s61
      %s83 = sphi 0, %s85
      %s86 = sphi 0, %s83
      %s87 = sphi 0, %s86
      %s103 = sphi 0, %s87
      %s107 = sphi 0, %s107
      %s109 = sphi 0, %s107
      %s110 = sphi 0, %s109
      %s124 = sphi 0, %s110
      %s128 = sphi 0, %s128
      %s130 = sphi 0, %s128
      %s131 = sphi 0, %s130
      %s145 = sphi 0, %s131
      %s149 = sphi 0, %s149
      %s151 = sphi 0, %s149
      %s152 = sphi 0, %s151
      %s166 = sphi 0, %s152
      %s172 = sphi 0, %s174
      %s175 = sphi 0, %s172
      %s176 = sphi 0, %s175
      %s192 = sphi 0, %s176
    $region4: #{tpu_custom_call.1} parent=1 // loop_header_branch
      %24 = sbr.rel (%p22) target = $region8
    $region5: #{tpu_custom_call.1} parent=1 // loop_body
      %s26 = ssub.s32 %s21, 1
      %s27 = ssub.s32 %s21, 2
      %s28 = sadd.s32 %s21, 1
      %s29 = ssub.s32 %s21, %s28
      %p30 = scmp.eq.s32.totalorder %s29, 0
      %s32 = sadd.s32 %s31, 1
      %s33 = scalar_select %p30, %s31, %s32
      %p36 = pneg %p30
      %p37 = scmp.eq.s32.totalorder %s21, 3
      %p38 = por %p36, %p37
      %p39 = scmp.ne.s32.totalorder %s31, %s34
      %p40 = scmp.eq.s32.totalorder %s21, 0
      %p41 = por %p39, %p40
      %p42 = scmp.ne.s32.totalorder %s31, %s34
      %p43 = scmp.eq.s32.totalorder %s26, 3
      %p44 = por %p42, %p43
      %p45 = scmp.ne.s32.totalorder %s34, %s35
      %p46 = scmp.eq.s32.totalorder %s26, 0
      %p47 = por %p45, %p46
      %p48 = scmp.ne.s32.totalorder %s34, %s35
      %p49 = scmp.eq.s32.totalorder %s27, 3
      %p50 = por %p48, %p49
      %p52 = scmp.ne.s32.totalorder %s35, %s51
      %p53 = scmp.eq.s32.totalorder %s27, 0
      %p54 = por %p52, %p53
      %s55 = ssub.s32 %s21, %s28
      %p56 = scmp.eq.s32.totalorder %s55, 0
      %s58 = sadd.s32 %s57, 1
      %s59 = scalar_select %p56, %s57, %s58
      %p62 = pneg %p56
      %p63 = scmp.eq.s32.totalorder %s21, 3
      %p64 = por %p62, %p63
      %p65 = scmp.ne.s32.totalorder %s57, %s60
      %p66 = scmp.eq.s32.totalorder %s21, 0
      %p67 = por %p65, %p66
      %p68 = scmp.ne.s32.totalorder %s57, %s60
      %p69 = scmp.eq.s32.totalorder %s26, 3
      %p70 = por %p68, %p69
      %p71 = scmp.ne.s32.totalorder %s60, %s61
      %p72 = scmp.eq.s32.totalorder %s26, 0
      %p73 = por %p71, %p72
      %p74 = scmp.ne.s32.totalorder %s60, %s61
      %p75 = scmp.eq.s32.totalorder %s27, 3
      %p76 = por %p74, %p75
      %p78 = scmp.ne.s32.totalorder %s61, %s77
      %p79 = scmp.eq.s32.totalorder %s27, 0
      %p80 = por %p78, %p79
      %s81 = ssub.s32 %s21, %s28
      %p82 = scmp.eq.s32.totalorder %s81, 0
      %s84 = sadd.s32 %s83, 1
      %s85 = scalar_select %p82, %s83, %s84
      %p88 = pneg %p82
      %p89 = scmp.eq.s32.totalorder %s21, 3
      %p90 = por %p88, %p89
      %p91 = scmp.ne.s32.totalorder %s83, %s86
      %p92 = scmp.eq.s32.totalorder %s21, 0
      %p93 = por %p91, %p92
      %p94 = scmp.ne.s32.totalorder %s83, %s86
      %p95 = scmp.eq.s32.totalorder %s26, 3
      %p96 = por %p94, %p95
      %p97 = scmp.ne.s32.totalorder %s86, %s87
      %p98 = scmp.eq.s32.totalorder %s26, 0
      %p99 = por %p97, %p98
      %p100 = scmp.ne.s32.totalorder %s86, %s87
      %p101 = scmp.eq.s32.totalorder %s27, 3
      %p102 = por %p100, %p101
      %p104 = scmp.ne.s32.totalorder %s87, %s103
      %p105 = scmp.eq.s32.totalorder %s27, 0
      %p106 = por %p104, %p105
      %s108 = sadd.s32 %s107, 1
      %p111 = scmp.eq.s32.totalorder %s21, 3
      %p112 = scmp.ne.s32.totalorder %s107, %s109
      %p113 = scmp.eq.s32.totalorder %s21, 0
      %p114 = por %p112, %p113
      %p115 = scmp.ne.s32.totalorder %s107, %s109
      %p116 = scmp.eq.s32.totalorder %s26, 3
      %p117 = por %p115, %p116
      %p118 = scmp.ne.s32.totalorder %s109, %s110
      %p119 = scmp.eq.s32.totalorder %s26, 0
      %p120 = por %p118, %p119
      %p121 = scmp.ne.s32.totalorder %s109, %s110
      %p122 = scmp.eq.s32.totalorder %s27, 3
      %p123 = por %p121, %p122
      %p125 = scmp.ne.s32.totalorder %s110, %s124
      %p126 = scmp.eq.s32.totalorder %s27, 0
      %p127 = por %p125, %p126
      %s129 = sadd.s32 %s128, 1
      %p132 = scmp.eq.s32.totalorder %s21, 3
      %p133 = scmp.ne.s32.totalorder %s128, %s130
      %p134 = scmp.eq.s32.totalorder %s21, 0
      %p135 = por %p133, %p134
      %p136 = scmp.ne.s32.totalorder %s128, %s130
      %p137 = scmp.eq.s32.totalorder %s26, 3
      %p138 = por %p136, %p137
      %p139 = scmp.ne.s32.totalorder %s130, %s131
      %p140 = scmp.eq.s32.totalorder %s26, 0
      %p141 = por %p139, %p140
      %p142 = scmp.ne.s32.totalorder %s130, %s131
      %p143 = scmp.eq.s32.totalorder %s27, 3
      %p144 = por %p142, %p143
      %p146 = scmp.ne.s32.totalorder %s131, %s145
      %p147 = scmp.eq.s32.totalorder %s27, 0
      %p148 = por %p146, %p147
      %s150 = sadd.s32 %s149, 1
      %p153 = scmp.eq.s32.totalorder %s21, 3
      %p154 = scmp.ne.s32.totalorder %s149, %s151
      %p155 = scmp.eq.s32.totalorder %s21, 0
      %p156 = por %p154, %p155
      %p157 = scmp.ne.s32.totalorder %s149, %s151
      %p158 = scmp.eq.s32.totalorder %s26, 3
      %p159 = por %p157, %p158
      %p160 = scmp.ne.s32.totalorder %s151, %s152
      %p161 = scmp.eq.s32.totalorder %s26, 0
      %p162 = por %p160, %p161
      %p163 = scmp.ne.s32.totalorder %s151, %s152
      %p164 = scmp.eq.s32.totalorder %s27, 3
      %p165 = por %p163, %p164
      %p167 = scmp.ne.s32.totalorder %s152, %s166
      %p168 = scmp.eq.s32.totalorder %s27, 0
      %p169 = por %p167, %p168
      %s170 = ssub.s32 %s21, %s28
      %p171 = scmp.eq.s32.totalorder %s170, 0
      %s173 = sadd.s32 %s172, 1
      %s174 = scalar_select %p171, %s172, %s173
      %p177 = pneg %p171
      %p178 = scmp.eq.s32.totalorder %s21, 3
      %p179 = por %p177, %p178
      %p180 = scmp.ne.s32.totalorder %s172, %s175
      %p181 = scmp.eq.s32.totalorder %s21, 0
      %p182 = por %p180, %p181
      %p183 = scmp.ne.s32.totalorder %s172, %s175
      %p184 = scmp.eq.s32.totalorder %s26, 3
      %p185 = por %p183, %p184
      %p186 = scmp.ne.s32.totalorder %s175, %s176
      %p187 = scmp.eq.s32.totalorder %s26, 0
      %p188 = por %p186, %p187
      %p189 = scmp.ne.s32.totalorder %s175, %s176
      %p190 = scmp.eq.s32.totalorder %s27, 3
      %p191 = por %p189, %p190
      %p193 = scmp.ne.s32.totalorder %s176, %s192
      %p194 = scmp.eq.s32.totalorder %s27, 0
      %p195 = por %p193, %p194
      %p196 = scmp.le.s32.totalorder 1, %s21
      %p197 = scmp.lt.s32.totalorder %s21, 5
      %p198 = pnand %p196, %p197
      %p199 = pneg %p198
      // Predicated region
      $region9: #{tpu_custom_call.1} parent=5 // pred_check
        _
      $region10: #{tpu_custom_call.1} parent=5 // pred_check_branch
        %201 = sbr.rel (%p198) target = $region12
      $region11: #{tpu_custom_call.1} parent=5 // pred_region
        %s202 = ssub.s32 %s21, 1
        // Predicated region
        $region13: #{tpu_custom_call.1} parent=11 // pred_check
          %p203 = pneg %p120
        $region14: #{tpu_custom_call.1} parent=11 // pred_check_branch
          %205 = sbr.rel (%p203) target = $region16
        $region15: #{tpu_custom_call.1} parent=11 // pred_region
          _
        $region16: #{tpu_custom_call.1} parent=11 // pred_fallthru
          _
        // Predicated region
        $region17: #{tpu_custom_call.1} parent=11 // pred_check
          %p206 = pneg %p141
        $region18: #{tpu_custom_call.1} parent=11 // pred_check_branch
          %208 = sbr.rel (%p206) target = $region20
        $region19: #{tpu_custom_call.1} parent=11 // pred_region
          _
        $region20: #{tpu_custom_call.1} parent=11 // pred_fallthru
          _
        // Predicated region
        $region21: #{tpu_custom_call.1} parent=11 // pred_check
          %p209 = pneg %p162
        $region22: #{tpu_custom_call.1} parent=11 // pred_check_branch
          %211 = sbr.rel (%p209) target = $region24
        $region23: #{tpu_custom_call.1} parent=11 // pred_region
          _
        $region24: #{tpu_custom_call.1} parent=11 // pred_fallthru
          _
      $region12: #{tpu_custom_call.1} parent=5 // pred_fallthru
        _
      %p212 = scmp.lt.s32.totalorder %s21, 4
      // Predicated region
      $region25: #{tpu_custom_call.1} parent=5 // pred_check
        %p213 = pneg %p212
      $region26: #{tpu_custom_call.1} parent=5 // pred_check_branch
        %215 = sbr.rel (%p213) target = $region28
      $region27: #{tpu_custom_call.1} parent=5 // pred_region
        // Predicated region
        $region29: #{tpu_custom_call.1} parent=27 // pred_check
          %p216 = pneg %p41
        $region30: #{tpu_custom_call.1} parent=27 // pred_check_branch
          %218 = sbr.rel (%p216) target = $region32
        $region31: #{tpu_custom_call.1} parent=27 // pred_region
          %s219 = sand.u32 %s31, 1
          %s220 = sand.u32 %s31, 1
          %s221 = smul.addr %s220, 16
          %s222 = scalar_lea.vmem [#allocation2], %s221
          %s223 = smul.addr %s21, 4
          %s224 = scalar_lea.vmem %s0, %s223
          // Predicated region
          $region33: #{tpu_custom_call.1} parent=31 // pred_check
            _
          $region34: #{tpu_custom_call.1} parent=31 // pred_check_branch
            %226 = sbr.rel (0) target = $region36
          $region35: #{tpu_custom_call.1} parent=31 // pred_region
            // Predicated region
            $region37: #{tpu_custom_call.1} parent=35 // pred_check
              _
            $region38: #{tpu_custom_call.1} parent=35 // pred_check_branch
              %228 = sbr.rel target = $region40
            $region39: #{tpu_custom_call.1} parent=35 // pred_region
              // Predicated region
              $region52: #{tpu_custom_call.1} parent=39 // pred_check
                _
              $region53: #{tpu_custom_call.1} parent=39 // pred_check_branch
                %249 = sbr.rel (0) target = $region55
              $region54: #{tpu_custom_call.1} parent=39 // pred_region
                loop: start=0, step=1, limit=1
                $region56: #{tpu_custom_call.1} parent=54 // loop_pre_header
                  _
                $region57: #{tpu_custom_call.1} parent=54 // loop_header
                  %s251 = sphi 0, %s255
                  %p252 = scmp.ge.s32.totalorder %s251, 1
                  %s256 = sphi %s224, %s224
                  %s257 = sphi %s222, %s222
                $region58: #{tpu_custom_call.1} parent=54 // loop_header_branch
                  %254 = sbr.rel (%p252) target = $region62
                $region59: #{tpu_custom_call.1} parent=54 // loop_body
                  _
                $region60: #{tpu_custom_call.1} parent=54 // loop_footer
                  %s255 = sadd.s32 1, %s251
                $region61: #{tpu_custom_call.1} parent=54 // loop_footer_branch
                  %250 = sbr.rel target = $region57
                $region62: #{tpu_custom_call.1} parent=54 // loop_exit
                  _
                loop: start=0, step=1, limit=1
                $region63: #{tpu_custom_call.1} parent=54 // loop_pre_header
                  _
                $region64: #{tpu_custom_call.1} parent=54 // loop_header
                  %s260 = sphi 0, %s264
                  %p261 = scmp.ge.s32.totalorder %s260, 1
                  %s265 = sphi %s224, %s224
                  %s266 = sphi %s222, %s222
                $region65: #{tpu_custom_call.1} parent=54 // loop_header_branch
                  %263 = sbr.rel (%p261) target = $region69
                $region66: #{tpu_custom_call.1} parent=54 // loop_body
                  %v267 = vld [vmem:[%s265] sm:$0xf]
                  %268 = vst [vmem:[%s266] sm:$0xf] %v267
                  %v269 = vld [vmem:[%s265 + $0x10] sm:$0xf]
                  %270 = vst [vmem:[%s266 + $0x4] sm:$0xf] %v269
                  %v271 = vld [vmem:[%s265 + $0x20] sm:$0xf]
                  %272 = vst [vmem:[%s266 + $0x8] sm:$0xf] %v271
                  %v273 = vld [vmem:[%s265 + $0x30] sm:$0xf]
                  %274 = vst [vmem:[%s266 + $0xc] sm:$0xf] %v273
                $region67: #{tpu_custom_call.1} parent=54 // loop_footer
                  %s264 = sadd.s32 1, %s260
                $region68: #{tpu_custom_call.1} parent=54 // loop_footer_branch
                  %259 = sbr.rel target = $region64
                $region69: #{tpu_custom_call.1} parent=54 // loop_exit
                  _
              $region55: #{tpu_custom_call.1} parent=39 // pred_fallthru
                _
            $region40: #{tpu_custom_call.1} parent=35 // pred_fallthru
              _
            // Predicated region
            $region41: #{tpu_custom_call.1} parent=35 // pred_check
              _
            $region42: #{tpu_custom_call.1} parent=35 // pred_check_branch
              %230 = sbr.rel (0) target = $region44
            $region43: #{tpu_custom_call.1} parent=35 // pred_region
              loop: start=0, step=1, limit=1
              $region45: #{tpu_custom_call.1} parent=43 // loop_pre_header
                _
              $region46: #{tpu_custom_call.1} parent=43 // loop_header
                %s233 = sphi 0, %s237
                %p234 = scmp.ge.s32.totalorder %s233, 1
                %s238 = sphi %s224, %s224
                %s239 = sphi %s222, %s222
              $region47: #{tpu_custom_call.1} parent=43 // loop_header_branch
                %236 = sbr.rel (%p234) target = $region51
              $region48: #{tpu_custom_call.1} parent=43 // loop_body
                %v240 = vld [vmem:[%s238] sm:$0xf]
                %241 = vst [vmem:[%s239] sm:$0xf] %v240
                %v242 = vld [vmem:[%s238 + $0x10] sm:$0xf]
                %243 = vst [vmem:[%s239 + $0x4] sm:$0xf] %v242
                %v244 = vld [vmem:[%s238 + $0x20] sm:$0xf]
                %245 = vst [vmem:[%s239 + $0x8] sm:$0xf] %v244
                %v246 = vld [vmem:[%s238 + $0x30] sm:$0xf]
                %247 = vst [vmem:[%s239 + $0xc] sm:$0xf] %v246
              $region49: #{tpu_custom_call.1} parent=43 // loop_footer
                %s237 = sadd.s32 1, %s233
              $region50: #{tpu_custom_call.1} parent=43 // loop_footer_branch
                %232 = sbr.rel target = $region46
              $region51: #{tpu_custom_call.1} parent=43 // loop_exit
                _
            $region44: #{tpu_custom_call.1} parent=35 // pred_fallthru
              _
          $region36: #{tpu_custom_call.1} parent=31 // pred_fallthru
            _
          %275 = vnop
        $region32: #{tpu_custom_call.1} parent=27 // pred_fallthru
          _
        // Predicated region
        $region70: #{tpu_custom_call.1} parent=27 // pred_check
          %p276 = pneg %p67
        $region71: #{tpu_custom_call.1} parent=27 // pred_check_branch
          %278 = sbr.rel (%p276) target = $region73
        $region72: #{tpu_custom_call.1} parent=27 // pred_region
          %s279 = sand.u32 %s57, 1
          %s280 = scalar_lea.sflag [#allocation4], %s279
          %s281 = sand.u32 %s57, 1
          %s282 = smul.addr %s281, 8
          %s283 = scalar_lea.vmem [#allocation3], %s282
          %s285 = ssub.s32 128, 128
          %286 = vsyncadd %s280, %s285
          %s287 = smul.addr %s21, 128
          %s288 = scalar_lea.hbm %s1, %s287
          %s290 = sshll.u32 %s283, 4
          %s291 = int_to_ptr.vmem [resolvable:$true] %s290
          %293 = dma.hbm_to_vmem [thread:$0]  %s288, 128, %s291, %s280
        $region73: #{tpu_custom_call.1} parent=27 // pred_fallthru
          _
        // Predicated region
        $region74: #{tpu_custom_call.1} parent=27 // pred_check
          %p294 = pneg %p93
        $region75: #{tpu_custom_call.1} parent=27 // pred_check_branch
          %296 = sbr.rel (%p294) target = $region77
        $region76: #{tpu_custom_call.1} parent=27 // pred_region
          %s297 = sand.u32 %s83, 1
          %s298 = scalar_lea.sflag [#allocation7], %s297
          %s299 = sand.u32 %s83, 1
          %s300 = smul.addr %s299, 64
          %s301 = scalar_lea.vmem [#allocation6], %s300
          %s303 = ssub.s32 1024, 1024
          %304 = vsyncadd %s298, %s303
          %s305 = smul.addr %s21, 16
          %s306 = smul.addr %s305, 64
          %s307 = scalar_lea.hbm %s2, %s306
          %s308 = sshll.u32 %s301, 4
          %s309 = int_to_ptr.vmem [resolvable:$true] %s308
          %314 = dma.hbm_to_vmem [thread:$0]  %s307, 1024, %s309, %s298, 64, 64, 4
        $region77: #{tpu_custom_call.1} parent=27 // pred_fallthru
          _
      $region28: #{tpu_custom_call.1} parent=5 // pred_fallthru
        _
      %p315 = scmp.le.s32.totalorder 1, %s21
      %p316 = scmp.lt.s32.totalorder %s21, 5
      %p317 = pnand %p315, %p316
      %p318 = pneg %p317
      // Predicated region
      $region78: #{tpu_custom_call.1} parent=5 // pred_check
        _
      $region79: #{tpu_custom_call.1} parent=5 // pred_check_branch
        %320 = sbr.rel (%p317) target = $region81
      $region80: #{tpu_custom_call.1} parent=5 // pred_region
        %s321 = ssub.s32 %s21, 1
        %s322 = sand.u32 %s34, 1
        %s323 = sand.u32 %s34, 1
        %s324 = smul.addr %s323, 16
        %s325 = scalar_lea.vmem [#allocation2], %s324
        // Predicated region
        $region82: #{tpu_custom_call.1} parent=80 // pred_check
          %p326 = pneg %p47
        $region83: #{tpu_custom_call.1} parent=80 // pred_check_branch
          %328 = sbr.rel (%p326) target = $region85
        $region84: #{tpu_custom_call.1} parent=80 // pred_region
          _
        $region85: #{tpu_custom_call.1} parent=80 // pred_fallthru
          _
        %s329 = sand.u32 %s60, 1
        %s330 = scalar_lea.sflag [#allocation4], %s329
        %s331 = sand.u32 %s60, 1
        %s332 = smul.addr %s331, 8
        %s333 = scalar_lea.vmem [#allocation3], %s332
        // Predicated region
        $region86: #{tpu_custom_call.1} parent=80 // pred_check
          %p334 = pneg %p73
        $region87: #{tpu_custom_call.1} parent=80 // pred_check_branch
          %336 = sbr.rel (%p334) target = $region89
        $region88: #{tpu_custom_call.1} parent=80 // pred_region
          %337 = dma.done %s330, 128
        $region89: #{tpu_custom_call.1} parent=80 // pred_fallthru
          _
        %s338 = sand.u32 %s86, 1
        %s339 = scalar_lea.sflag [#allocation7], %s338
        %s340 = sand.u32 %s86, 1
        %s341 = smul.addr %s340, 64
        %s342 = scalar_lea.vmem [#allocation6], %s341
        // Predicated region
        $region90: #{tpu_custom_call.1} parent=80 // pred_check
          %p343 = pneg %p99
        $region91: #{tpu_custom_call.1} parent=80 // pred_check_branch
          %345 = sbr.rel (%p343) target = $region93
        $region92: #{tpu_custom_call.1} parent=80 // pred_region
          %346 = dma.done %s339, 1024
        $region93: #{tpu_custom_call.1} parent=80 // pred_fallthru
          _
        %s347 = sand.u32 %s34, 1
        %s348 = sand.u32 %s34, 1
        %s349 = smul.addr %s348, 16
        %s350 = scalar_lea.vmem [#allocation2], %s349
        %p351 = pneg %p47
        %p352 = pneg %p44
        %s353 = sand.u32 %s60, 1
        %s354 = scalar_lea.sflag [#allocation4], %s353
        %s355 = sand.u32 %s60, 1
        %s356 = smul.addr %s355, 8
        %s357 = scalar_lea.vmem [#allocation3], %s356
        %p358 = pneg %p73
        %p359 = pneg %p70
        %s360 = sand.u32 %s86, 1
        %s361 = scalar_lea.sflag [#allocation7], %s360
        %s362 = sand.u32 %s86, 1
        %s363 = smul.addr %s362, 64
        %s364 = scalar_lea.vmem [#allocation6], %s363
        %p365 = pneg %p99
        %p366 = pneg %p96
        %p367 = pneg %p120
        %p368 = pneg %p117
        %p369 = pneg %p141
        %p370 = pneg %p138
        %p371 = pneg %p162
        %p372 = pneg %p159
        %p373 = pneg %p188
        %p374 = pneg %p185
        %s375 = sand.u32 %s175, 1
        %s376 = scalar_lea.sflag [#allocation5], %s375
        %s377 = sand.u32 %s175, 1
        %s378 = smul.addr %s377, 8
        %s379 = scalar_lea.vmem [#allocation8], %s378
        %v381 = vld [vmem:[%s342] sm:$0xf]
        %v382 = vld [vmem:[%s342 + $0x4] sm:$0xf]
        %v383 = vld [vmem:[%s342 + $0x8] sm:$0xf]
        %v384 = vld [vmem:[%s342 + $0xc] sm:$0xf]
        %v385 = vld [vmem:[%s342 + $0x10] sm:$0xf]
        %v386 = vld [vmem:[%s342 + $0x14] sm:$0xf]
        %v387 = vld [vmem:[%s342 + $0x18] sm:$0xf]
        %v388 = vld [vmem:[%s342 + $0x1c] sm:$0xf]
        %v389 = vld [vmem:[%s342 + $0x20] sm:$0xf]
        %v390 = vld [vmem:[%s342 + $0x24] sm:$0xf]
        %v391 = vld [vmem:[%s342 + $0x28] sm:$0xf]
        %v392 = vld [vmem:[%s342 + $0x2c] sm:$0xf]
        %v393 = vld [vmem:[%s342 + $0x30] sm:$0xf]
        %v394 = vld [vmem:[%s342 + $0x34] sm:$0xf]
        %v395 = vld [vmem:[%s342 + $0x38] sm:$0xf]
        %v396 = vld [vmem:[%s342 + $0x3c] sm:$0xf]
        %v397 = vld [vmem:[%s5] sm:$0xf]
        %v398 = vld [vmem:[%s5 + $0x4] sm:$0xf]
        %v399 = vld [vmem:[%s5 + $0x8] sm:$0xf]
        %v400 = vld [vmem:[%s5 + $0xc] sm:$0xf]
        %v401 = vld [vmem:[%s5 + $0x10] sm:$0xf]
        %v402 = vld [vmem:[%s5 + $0x14] sm:$0xf]
        %v403 = vld [vmem:[%s5 + $0x18] sm:$0xf]
        %v404 = vld [vmem:[%s5 + $0x1c] sm:$0xf]
        %v405 = vld [vmem:[%s5 + $0x20] sm:$0xf]
        %v406 = vld [vmem:[%s5 + $0x24] sm:$0xf]
        %v407 = vld [vmem:[%s5 + $0x28] sm:$0xf]
        %v408 = vld [vmem:[%s5 + $0x2c] sm:$0xf]
        %v409 = vld [vmem:[%s5 + $0x30] sm:$0xf]
        %v410 = vld [vmem:[%s5 + $0x34] sm:$0xf]
        %v411 = vld [vmem:[%s5 + $0x38] sm:$0xf]
        %v412 = vld [vmem:[%s5 + $0x3c] sm:$0xf]
        %v413 = vld [vmem:[%s4] sm:$0xff]
        %v414 = vld [vmem:[%s4 + $0x8] sm:$0xff]
        %v415 = vld [vmem:[%s4 + $0x10] sm:$0xff]
        %v416 = vld [vmem:[%s4 + $0x18] sm:$0xff]
        %v417 = vld [vmem:[%s333] sm:$0x1]
        %v418 = vld [vmem:[%s333 + $0x1] sm:$0x1]
        %v419 = vld [vmem:[%s333 + $0x2] sm:$0x1]
        %v420 = vld [vmem:[%s3] sm:$0xf]
        %v421 = vld [vmem:[%s3 + $0x4] sm:$0xf]
        %v422 = vld [vmem:[%s3 + $0x8] sm:$0xf]
        %v423 = vld [vmem:[%s3 + $0xc] sm:$0xf]
        %v424 = vld [vmem:[%s3 + $0x10] sm:$0xf]
        %v425 = vld [vmem:[%s3 + $0x14] sm:$0xf]
        %v426 = vld [vmem:[%s3 + $0x18] sm:$0xf]
        %v427 = vld [vmem:[%s3 + $0x1c] sm:$0xf]
        %v428 = vld [vmem:[%s3 + $0x20] sm:$0xf]
        %v429 = vld [vmem:[%s3 + $0x24] sm:$0xf]
        %v430 = vld [vmem:[%s3 + $0x28] sm:$0xf]
        %v431 = vld [vmem:[%s3 + $0x2c] sm:$0xf]
        %v432 = vld [vmem:[%s3 + $0x30] sm:$0xf]
        %v433 = vld [vmem:[%s3 + $0x34] sm:$0xf]
        %v434 = vld [vmem:[%s3 + $0x38] sm:$0xf]
        %v435 = vld [vmem:[%s3 + $0x3c] sm:$0xf]
        %v436 = vld [vmem:[%s3 + $0x40] sm:$0xf]
        %v437 = vld [vmem:[%s3 + $0x44] sm:$0xf]
        %v438 = vld [vmem:[%s3 + $0x48] sm:$0x1]
        %v439 = vld [vmem:[%s325] sm:$0xf]
        %v440 = vld [vmem:[%s325 + $0x4] sm:$0xf]
        %v441 = vld [vmem:[%s325 + $0x8] sm:$0xf]
        %v442 = vld [vmem:[%s325 + $0xc] sm:$0xf]
        %444 = vset.pattern.permute.xlu0 0
        %445 = vperm.xlu0 %444, %v413
        %v446 = vpop.permute.xlu0 %445
        %449 = vset.pattern.permute.xlu0 0
        %450 = vperm.xlu0 %449, %v414
        %v451 = vpop.permute.xlu0 %450
        %454 = vset.pattern.permute.xlu0 0
        %455 = vperm.xlu0 %454, %v415
        %v456 = vpop.permute.xlu0 %455
        %459 = vset.pattern.permute.xlu0 0
        %460 = vperm.xlu0 %459, %v416
        %v461 = vpop.permute.xlu0 %460
        %v467 = vunpack.c.l.b16 %v420
        %v468 = vunpack.c.l.b16 %v421
        %v469 = vunpack.c.l.b16 %v422
        %v470 = vunpack.c.l.b16 %v423
        %v471 = vpack.c.b16 %v468, %v467
        %v472 = vpack.c.b16 %v470, %v469
        %v477 = vunpack.c.l.b16 %v439
        %v478 = vunpack.c.l.b16 %v440
        %v479 = vunpack.c.l.b16 %v441
        %v480 = vunpack.c.l.b16 %v442
        %v481 = vpack.c.b16 %v478, %v477
        %v482 = vpack.c.b16 %v480, %v479
        %vm485 = vcmask 261120
        %v487 = vsel %vm485, %v471, 0
        %v490 = vsel %vm485, %v472, 0
        %492 = vmatprep.subr.bf16.mxu0 0
        %493 = vmatpush1.bf16.msra.mxu0 %v481
        %494 = vmatprep.subr.bf16.mxu0 0
        %495 = vmatpush1.bf16.msra.mxu0 %v482
        %496 = vmatprep.subr.bf16.mxu0 0
        %497 = vmatpush1.bf16.msra.mxu0 0
        %498 = vmatprep.subr.bf16.mxu0 0
        %499 = vmatpush1.bf16.msra.mxu0 0
        %500 = vmatprep.subr.bf16.mxu0 0
        %501 = vmatpush1.bf16.msra.mxu0 0
        %502 = vmatprep.subr.bf16.mxu0 0
        %503 = vmatpush1.bf16.msra.mxu0 0
        %504 = vmatprep.subr.bf16.mxu0 0
        %505 = vmatpush1.bf16.msra.mxu0 0
        %506 = vmatprep.subr.bf16.mxu0 0
        %507 = vmatpush1.bf16.msra.mxu0 0
        %508 = vmatprep.subr.bf16.mxu0 0
        %509 = vmatpush1.bf16.msra.mxu0 0
        %510 = vmatprep.subr.bf16.mxu0 0
        %511 = vmatpush1.bf16.msra.mxu0 0
        %512 = vmatprep.subr.bf16.mxu0 0
        %513 = vmatpush1.bf16.msra.mxu0 0
        %514 = vmatprep.subr.bf16.mxu0 0
        %515 = vmatpush1.bf16.msra.mxu0 0
        %516 = vmatprep.subr.bf16.mxu0 0
        %517 = vmatpush1.bf16.msra.mxu0 0
        %518 = vmatprep.subr.bf16.mxu0 0
        %519 = vmatpush1.bf16.msra.mxu0 0
        %520 = vmatprep.subr.bf16.mxu0 0
        %521 = vmatpush1.bf16.msra.mxu0 0
        %522 = vmatprep.subr.bf16.mxu0 0
        %523 = vmatpush1.bf16.msra.mxu0 0
        %524 = vmatprep.mubr.bf16.mxu0 0
        %525 = vmatmul.mubr.bf16.gmra.mrb[0].mxu0 %v487
        %v526 = vpop.f32.mrb[0].mxu0
        %v527 = vadd.f32 %v446, %v526
        %v528 = vpop.f32.mrb[0].mxu0
        %v529 = vpop.f32.mrb[0].mxu0
        %v530 = vadd.f32 %v451, %v529
        %v531 = vpop.f32.mrb[0].mxu0
        %532 = vmatprep.mubr.bf16.mxu0 0
        %533 = vmatmul.mubr.bf16.gmra.mrb[0].mxu0 %v490
        %v534 = vpop.f32.mrb[0].mxu0
        %v535 = vadd.f32 %v456, %v534
        %v536 = vpop.f32.mrb[0].mxu0
        %v537 = vpop.f32.mrb[0].mxu0
        %v538 = vadd.f32 %v461, %v537
        %v539 = vpop.f32.mrb[0].mxu0
        %540 = vdwg.mxu0
        %v541 = vpack.c.bf16 %v530, %v527
        %v542 = vpack.c.bf16 %v538, %v535
        %v547 = vunpack.c.l.b16 %v424
        %v548 = vunpack.c.l.b16 %v425
        %v549 = vunpack.c.l.b16 %v426
        %v550 = vunpack.c.l.b16 %v427
        %v551 = vpack.c.b16 %v548, %v547
        %v552 = vpack.c.b16 %v550, %v549
        %v554 = vsel %vm485, %v551, 0
        %v557 = vsel %vm485, %v552, 0
        %559 = vmatprep.subr.bf16.mxu0 0
        %560 = vmatpush1.bf16.msra.mxu0 %v541
        %561 = vmatprep.subr.bf16.mxu0 0
        %562 = vmatpush1.bf16.msra.mxu0 %v542
        %563 = vmatprep.subr.bf16.mxu0 0
        %564 = vmatpush1.bf16.msra.mxu0 0
        %565 = vmatprep.subr.bf16.mxu0 0
        %566 = vmatpush1.bf16.msra.mxu0 0
        %567 = vmatprep.subr.bf16.mxu0 0
        %568 = vmatpush1.bf16.msra.mxu0 0
        %569 = vmatprep.subr.bf16.mxu0 0
        %570 = vmatpush1.bf16.msra.mxu0 0
        %571 = vmatprep.subr.bf16.mxu0 0
        %572 = vmatpush1.bf16.msra.mxu0 0
        %573 = vmatprep.subr.bf16.mxu0 0
        %574 = vmatpush1.bf16.msra.mxu0 0
        %575 = vmatprep.subr.bf16.mxu0 0
        %576 = vmatpush1.bf16.msra.mxu0 0
        %577 = vmatprep.subr.bf16.mxu0 0
        %578 = vmatpush1.bf16.msra.mxu0 0
        %579 = vmatprep.subr.bf16.mxu0 0
        %580 = vmatpush1.bf16.msra.mxu0 0
        %581 = vmatprep.subr.bf16.mxu0 0
        %582 = vmatpush1.bf16.msra.mxu0 0
        %583 = vmatprep.subr.bf16.mxu0 0
        %584 = vmatpush1.bf16.msra.mxu0 0
        %585 = vmatprep.subr.bf16.mxu0 0
        %586 = vmatpush1.bf16.msra.mxu0 0
        %587 = vmatprep.subr.bf16.mxu0 0
        %588 = vmatpush1.bf16.msra.mxu0 0
        %589 = vmatprep.subr.bf16.mxu0 0
        %590 = vmatpush1.bf16.msra.mxu0 0
        %591 = vmatprep.mubr.bf16.mxu0 0
        %592 = vmatmul.mubr.bf16.gmra.mrb[0].mxu0 %v554
        %v593 = vpop.f32.mrb[0].mxu0
        %v594 = vadd.f32 0.0, %v593
        %v595 = vpop.f32.mrb[0].mxu0
        %v596 = vpop.f32.mrb[0].mxu0
        %v597 = vadd.f32 0.0, %v596
        %v598 = vpop.f32.mrb[0].mxu0
        %599 = vmatprep.mubr.bf16.mxu0 0
        %600 = vmatmul.mubr.bf16.gmra.mrb[0].mxu0 %v557
        %v601 = vpop.f32.mrb[0].mxu0
        %v602 = vadd.f32 0.0, %v601
        %v603 = vpop.f32.mrb[0].mxu0
        %v604 = vpop.f32.mrb[0].mxu0
        %v605 = vadd.f32 0.0, %v604
        %v606 = vpop.f32.mrb[0].mxu0
        %607 = vdwg.mxu0
        %v608 = vpack.c.bf16 %v597, %v594
        %v609 = vpack.c.bf16 %v605, %v602
        %610 = vset.pattern.permute.xlu0 1
        %611 = vperm.xlu0 %610, %v413
        %v612 = vpop.permute.xlu0 %611
        %614 = vset.pattern.permute.xlu0 1
        %615 = vperm.xlu0 %614, %v414
        %v616 = vpop.permute.xlu0 %615
        %618 = vset.pattern.permute.xlu0 1
        %619 = vperm.xlu0 %618, %v415
        %v620 = vpop.permute.xlu0 %619
        %622 = vset.pattern.permute.xlu0 1
        %623 = vperm.xlu0 %622, %v416
        %v624 = vpop.permute.xlu0 %623
        %v642 = vunpack.c.l.b16 %v381
        %v643 = vunpack.c.l.b16 %v382
        %v644 = vunpack.c.l.b16 %v383
        %v645 = vunpack.c.l.b16 %v384
        %v646 = vunpack.c.l.b16 %v385
        %v647 = vunpack.c.l.b16 %v386
        %v648 = vunpack.c.l.b16 %v387
        %v649 = vunpack.c.l.b16 %v388
        %v650 = vunpack.c.l.b16 %v389
        %v651 = vunpack.c.l.b16 %v390
        %v652 = vunpack.c.l.b16 %v391
        %v653 = vunpack.c.l.b16 %v392
        %v654 = vunpack.c.l.b16 %v393
        %v655 = vunpack.c.l.b16 %v394
        %v656 = vunpack.c.l.b16 %v395
        %v657 = vunpack.c.l.b16 %v396
        %v658 = vpack.c.b16 %v643, %v642
        %v659 = vpack.c.b16 %v645, %v644
        %v660 = vpack.c.b16 %v647, %v646
        %v661 = vpack.c.b16 %v649, %v648
        %v662 = vpack.c.b16 %v651, %v650
        %v663 = vpack.c.b16 %v653, %v652
        %v664 = vpack.c.b16 %v655, %v654
        %v665 = vpack.c.b16 %v657, %v656
        %674 = vmatprep.subr.bf16.mxu0 0
        %675 = vmatpush1.bf16.msra.mxu0 %v658
        %676 = vmatprep.subr.bf16.mxu0 0
        %677 = vmatpush1.bf16.msra.mxu0 %v659
        %678 = vmatprep.subr.bf16.mxu0 0
        %679 = vmatpush1.bf16.msra.mxu0 %v660
        %680 = vmatprep.subr.bf16.mxu0 0
        %681 = vmatpush1.bf16.msra.mxu0 %v661
        %682 = vmatprep.subr.bf16.mxu0 0
        %683 = vmatpush1.bf16.msra.mxu0 %v662
        %684 = vmatprep.subr.bf16.mxu0 0
        %685 = vmatpush1.bf16.msra.mxu0 %v663
        %686 = vmatprep.subr.bf16.mxu0 0
        %687 = vmatpush1.bf16.msra.mxu0 %v664
        %688 = vmatprep.subr.bf16.mxu0 0
        %689 = vmatpush1.bf16.msra.mxu0 %v665
        %690 = vmatprep.subr.bf16.mxu0 0
        %691 = vmatpush1.bf16.msra.mxu0 0
        %692 = vmatprep.subr.bf16.mxu0 0
        %693 = vmatpush1.bf16.msra.mxu0 0
        %694 = vmatprep.subr.bf16.mxu0 0
        %695 = vmatpush1.bf16.msra.mxu0 0
        %696 = vmatprep.subr.bf16.mxu0 0
        %697 = vmatpush1.bf16.msra.mxu0 0
        %698 = vmatprep.subr.bf16.mxu0 0
        %699 = vmatpush1.bf16.msra.mxu0 0
        %700 = vmatprep.subr.bf16.mxu0 0
        %701 = vmatpush1.bf16.msra.mxu0 0
        %702 = vmatprep.subr.bf16.mxu0 0
        %703 = vmatpush1.bf16.msra.mxu0 0
        %704 = vmatprep.subr.bf16.mxu0 0
        %705 = vmatpush1.bf16.msra.mxu0 0
        %706 = vmatprep.mubr.bf16.mxu0 0
        %707 = vmatmul.mubr.bf16.gmra.mrb[0].mxu0 %v608
        %v708 = vpop.f32.mrb[0].mxu0
        %v709 = vadd.f32 %v612, %v708
        %v710 = vpop.f32.mrb[0].mxu0
        %v711 = vpop.f32.mrb[0].mxu0
        %v712 = vadd.f32 %v616, %v711
        %v713 = vpop.f32.mrb[0].mxu0
        %714 = vmatprep.mubr.bf16.mxu0 0
        %715 = vmatmul.mubr.bf16.gmra.mrb[0].mxu0 %v609
        %v716 = vpop.f32.mrb[0].mxu0
        %v717 = vadd.f32 %v620, %v716
        %v718 = vpop.f32.mrb[0].mxu0
        %v719 = vpop.f32.mrb[0].mxu0
        %v720 = vadd.f32 %v624, %v719
        %v721 = vpop.f32.mrb[0].mxu0
        %722 = vdwg.mxu0
        %v723 = vadd.f32 %v709, %v527
        %v724 = vadd.f32 %v712, %v530
        %v725 = vadd.f32 %v717, %v535
        %v726 = vadd.f32 %v720, %v538
        %v727 = vmax.f32 %v723, 0.0
        %v728 = vmax.f32 %v724, 0.0
        %v729 = vmax.f32 %v725, 0.0
        %v730 = vmax.f32 %v726, 0.0
        %v731 = vpack.c.bf16 %v728, %v727
        %v732 = vpack.c.bf16 %v730, %v729
        %v737 = vunpack.c.l.b16 %v428
        %v738 = vunpack.c.l.b16 %v429
        %v739 = vunpack.c.l.b16 %v430
        %v740 = vunpack.c.l.b16 %v431
        %v741 = vpack.c.b16 %v738, %v737
        %v742 = vpack.c.b16 %v740, %v739
        %v744 = vsel %vm485, %v741, 0
        %v747 = vsel %vm485, %v742, 0
        %749 = vmatprep.subr.bf16.mxu0 0
        %750 = vmatpush1.bf16.msra.mxu0 %v731
        %751 = vmatprep.subr.bf16.mxu0 0
        %752 = vmatpush1.bf16.msra.mxu0 %v732
        %753 = vmatprep.subr.bf16.mxu0 0
        %754 = vmatpush1.bf16.msra.mxu0 0
        %755 = vmatprep.subr.bf16.mxu0 0
        %756 = vmatpush1.bf16.msra.mxu0 0
        %757 = vmatprep.subr.bf16.mxu0 0
        %758 = vmatpush1.bf16.msra.mxu0 0
        %759 = vmatprep.subr.bf16.mxu0 0
        %760 = vmatpush1.bf16.msra.mxu0 0
        %761 = vmatprep.subr.bf16.mxu0 0
        %762 = vmatpush1.bf16.msra.mxu0 0
        %763 = vmatprep.subr.bf16.mxu0 0
        %764 = vmatpush1.bf16.msra.mxu0 0
        %765 = vmatprep.subr.bf16.mxu0 0
        %766 = vmatpush1.bf16.msra.mxu0 0
        %767 = vmatprep.subr.bf16.mxu0 0
        %768 = vmatpush1.bf16.msra.mxu0 0
        %769 = vmatprep.subr.bf16.mxu0 0
        %770 = vmatpush1.bf16.msra.mxu0 0
        %771 = vmatprep.subr.bf16.mxu0 0
        %772 = vmatpush1.bf16.msra.mxu0 0
        %773 = vmatprep.subr.bf16.mxu0 0
        %774 = vmatpush1.bf16.msra.mxu0 0
        %775 = vmatprep.subr.bf16.mxu0 0
        %776 = vmatpush1.bf16.msra.mxu0 0
        %777 = vmatprep.subr.bf16.mxu0 0
        %778 = vmatpush1.bf16.msra.mxu0 0
        %779 = vmatprep.subr.bf16.mxu0 0
        %780 = vmatpush1.bf16.msra.mxu0 0
        %781 = vmatprep.mubr.bf16.mxu0 0
        %782 = vmatmul.mubr.bf16.gmra.mrb[0].mxu0 %v744
        %v783 = vpop.f32.mrb[0].mxu0
        %v784 = vadd.f32 0.0, %v783
        %v785 = vpop.f32.mrb[0].mxu0
        %v786 = vpop.f32.mrb[0].mxu0
        %v787 = vadd.f32 0.0, %v786
        %v788 = vpop.f32.mrb[0].mxu0
        %789 = vmatprep.mubr.bf16.mxu0 0
        %790 = vmatmul.mubr.bf16.gmra.mrb[0].mxu0 %v747
        %v791 = vpop.f32.mrb[0].mxu0
        %v792 = vadd.f32 0.0, %v791
        %v793 = vpop.f32.mrb[0].mxu0
        %v794 = vpop.f32.mrb[0].mxu0
        %v795 = vadd.f32 0.0, %v794
        %v796 = vpop.f32.mrb[0].mxu0
        %797 = vdwg.mxu0
        %v798 = vpack.c.bf16 %v787, %v784
        %v799 = vpack.c.bf16 %v795, %v792
        %800 = vset.pattern.permute.xlu0 2
        %801 = vperm.xlu0 %800, %v413
        %v802 = vpop.permute.xlu0 %801
        %804 = vset.pattern.permute.xlu0 2
        %805 = vperm.xlu0 %804, %v414
        %v806 = vpop.permute.xlu0 %805
        %808 = vset.pattern.permute.xlu0 2
        %809 = vperm.xlu0 %808, %v415
        %v810 = vpop.permute.xlu0 %809
        %812 = vset.pattern.permute.xlu0 2
        %813 = vperm.xlu0 %812, %v416
        %v814 = vpop.permute.xlu0 %813
        %816 = vmatprep.subr.bf16.mxu0 0
        %817 = vmatpush1.bf16.msra.mxu0 %v658
        %818 = vmatprep.subr.bf16.mxu0 0
        %819 = vmatpush1.bf16.msra.mxu0 %v659
        %820 = vmatprep.subr.bf16.mxu0 0
        %821 = vmatpush1.bf16.msra.mxu0 %v660
        %822 = vmatprep.subr.bf16.mxu0 0
        %823 = vmatpush1.bf16.msra.mxu0 %v661
        %824 = vmatprep.subr.bf16.mxu0 0
        %825 = vmatpush1.bf16.msra.mxu0 %v662
        %826 = vmatprep.subr.bf16.mxu0 0
        %827 = vmatpush1.bf16.msra.mxu0 %v663
        %828 = vmatprep.subr.bf16.mxu0 0
        %829 = vmatpush1.bf16.msra.mxu0 %v664
        %830 = vmatprep.subr.bf16.mxu0 0
        %831 = vmatpush1.bf16.msra.mxu0 %v665
        %832 = vmatprep.subr.bf16.mxu0 0
        %833 = vmatpush1.bf16.msra.mxu0 0
        %834 = vmatprep.subr.bf16.mxu0 0
        %835 = vmatpush1.bf16.msra.mxu0 0
        %836 = vmatprep.subr.bf16.mxu0 0
        %837 = vmatpush1.bf16.msra.mxu0 0
        %838 = vmatprep.subr.bf16.mxu0 0
        %839 = vmatpush1.bf16.msra.mxu0 0
        %840 = vmatprep.subr.bf16.mxu0 0
        %841 = vmatpush1.bf16.msra.mxu0 0
        %842 = vmatprep.subr.bf16.mxu0 0
        %843 = vmatpush1.bf16.msra.mxu0 0
        %844 = vmatprep.subr.bf16.mxu0 0
        %845 = vmatpush1.bf16.msra.mxu0 0
        %846 = vmatprep.subr.bf16.mxu0 0
        %847 = vmatpush1.bf16.msra.mxu0 0
        %848 = vmatprep.mubr.bf16.mxu0 0
        %849 = vmatmul.mubr.bf16.gmra.mrb[0].mxu0 %v798
        %v850 = vpop.f32.mrb[0].mxu0
        %v851 = vadd.f32 %v802, %v850
        %v852 = vpop.f32.mrb[0].mxu0
        %v853 = vpop.f32.mrb[0].mxu0
        %v854 = vadd.f32 %v806, %v853
        %v855 = vpop.f32.mrb[0].mxu0
        %856 = vmatprep.mubr.bf16.mxu0 0
        %857 = vmatmul.mubr.bf16.gmra.mrb[0].mxu0 %v799
        %v858 = vpop.f32.mrb[0].mxu0
        %v859 = vadd.f32 %v810, %v858
        %v860 = vpop.f32.mrb[0].mxu0
        %v861 = vpop.f32.mrb[0].mxu0
        %v862 = vadd.f32 %v814, %v861
        %v863 = vpop.f32.mrb[0].mxu0
        %864 = vdwg.mxu0
        %v865 = vadd.f32 %v851, %v727
        %v866 = vadd.f32 %v854, %v728
        %v867 = vadd.f32 %v859, %v729
        %v868 = vadd.f32 %v862, %v730
        %v869 = vpack.c.bf16 %v866, %v865
        %v870 = vpack.c.bf16 %v868, %v867
        %871 = vset.pattern.permute.xlu0 3
        %872 = vperm.xlu0 %871, %v413
        %v873 = vpop.permute.xlu0 %872
        %875 = vset.pattern.permute.xlu0 3
        %876 = vperm.xlu0 %875, %v414
        %v877 = vpop.permute.xlu0 %876
        %879 = vset.pattern.permute.xlu0 3
        %880 = vperm.xlu0 %879, %v415
        %v881 = vpop.permute.xlu0 %880
        %883 = vset.pattern.permute.xlu0 3
        %884 = vperm.xlu0 %883, %v416
        %v885 = vpop.permute.xlu0 %884
        %v891 = vunpack.c.l.b16 %v432
        %v892 = vunpack.c.l.b16 %v433
        %v893 = vunpack.c.l.b16 %v434
        %v894 = vunpack.c.l.b16 %v435
        %v895 = vpack.c.b16 %v892, %v891
        %v896 = vpack.c.b16 %v894, %v893
        %v898 = vsel %vm485, %v895, 0
        %v901 = vsel %vm485, %v896, 0
        %903 = vmatprep.subr.bf16.mxu0 0
        %904 = vmatpush1.bf16.msra.mxu0 %v869
        %905 = vmatprep.subr.bf16.mxu0 0
        %906 = vmatpush1.bf16.msra.mxu0 %v870
        %907 = vmatprep.subr.bf16.mxu0 0
        %908 = vmatpush1.bf16.msra.mxu0 0
        %909 = vmatprep.subr.bf16.mxu0 0
        %910 = vmatpush1.bf16.msra.mxu0 0
        %911 = vmatprep.subr.bf16.mxu0 0
        %912 = vmatpush1.bf16.msra.mxu0 0
        %913 = vmatprep.subr.bf16.mxu0 0
        %914 = vmatpush1.bf16.msra.mxu0 0
        %915 = vmatprep.subr.bf16.mxu0 0
        %916 = vmatpush1.bf16.msra.mxu0 0
        %917 = vmatprep.subr.bf16.mxu0 0
        %918 = vmatpush1.bf16.msra.mxu0 0
        %919 = vmatprep.subr.bf16.mxu0 0
        %920 = vmatpush1.bf16.msra.mxu0 0
        %921 = vmatprep.subr.bf16.mxu0 0
        %922 = vmatpush1.bf16.msra.mxu0 0
        %923 = vmatprep.subr.bf16.mxu0 0
        %924 = vmatpush1.bf16.msra.mxu0 0
        %925 = vmatprep.subr.bf16.mxu0 0
        %926 = vmatpush1.bf16.msra.mxu0 0
        %927 = vmatprep.subr.bf16.mxu0 0
        %928 = vmatpush1.bf16.msra.mxu0 0
        %929 = vmatprep.subr.bf16.mxu0 0
        %930 = vmatpush1.bf16.msra.mxu0 0
        %931 = vmatprep.subr.bf16.mxu0 0
        %932 = vmatpush1.bf16.msra.mxu0 0
        %933 = vmatprep.subr.bf16.mxu0 0
        %934 = vmatpush1.bf16.msra.mxu0 0
        %935 = vmatprep.mubr.bf16.mxu0 0
        %936 = vmatmul.mubr.bf16.gmra.mrb[0].mxu0 %v898
        %v937 = vpop.f32.mrb[0].mxu0
        %v938 = vadd.f32 %v873, %v937
        %v939 = vpop.f32.mrb[0].mxu0
        %v940 = vpop.f32.mrb[0].mxu0
        %v941 = vadd.f32 %v877, %v940
        %v942 = vpop.f32.mrb[0].mxu0
        %943 = vmatprep.mubr.bf16.mxu0 0
        %944 = vmatmul.mubr.bf16.gmra.mrb[0].mxu0 %v901
        %v945 = vpop.f32.mrb[0].mxu0
        %v946 = vadd.f32 %v881, %v945
        %v947 = vpop.f32.mrb[0].mxu0
        %v948 = vpop.f32.mrb[0].mxu0
        %v949 = vadd.f32 %v885, %v948
        %v950 = vpop.f32.mrb[0].mxu0
        %951 = vdwg.mxu0
        %v952 = vmax.f32 %v938, 0.0
        %v953 = vmax.f32 %v941, 0.0
        %v954 = vmax.f32 %v946, 0.0
        %v955 = vmax.f32 %v949, 0.0
        %v956 = vlaneseq
        %v957 = vshrl.u32 %v956, 7
        %v958 = vsub.s32 0, %v957
        %v959 = vrot.slane %v417, %v958
        %v960 = vmul.f32 %v959, %v952
        %v961 = vmul.f32 %v959, %v953
        %v962 = vmul.f32 %v959, %v954
        %v963 = vmul.f32 %v959, %v955
        %v964 = vlaneseq
        %v965 = vshrl.u32 %v964, 7
        %v966 = vsub.s32 0, %v965
        %v967 = vrot.slane %v418, %v966
        %v968 = vadd.f32 %v960, %v967
        %v969 = vadd.f32 %v961, %v967
        %v970 = vadd.f32 %v962, %v967
        %v971 = vadd.f32 %v963, %v967
        %v972 = vpack.c.bf16 %v969, %v968
        %v973 = vpack.c.bf16 %v971, %v970
        %974 = vset.pattern.permute.xlu0 4
        %975 = vperm.xlu0 %974, %v413
        %v976 = vpop.permute.xlu0 %975
        %978 = vset.pattern.permute.xlu0 4
        %979 = vperm.xlu0 %978, %v414
        %v980 = vpop.permute.xlu0 %979
        %v984 = vunpack.c.l.b16 %v436
        %v985 = vunpack.c.l.b16 %v437
        %v986 = vpack.c.b16 %v985, %v984
        %v988 = vsel %vm485, %v986, 0
        %990 = vmatprep.subr.bf16.mxu0 0
        %991 = vmatpush1.bf16.msra.mxu0 %v972
        %992 = vmatprep.subr.bf16.mxu0 0
        %993 = vmatpush1.bf16.msra.mxu0 %v973
        %994 = vmatprep.subr.bf16.mxu0 0
        %995 = vmatpush1.bf16.msra.mxu0 0
        %996 = vmatprep.subr.bf16.mxu0 0
        %997 = vmatpush1.bf16.msra.mxu0 0
        %998 = vmatprep.subr.bf16.mxu0 0
        %999 = vmatpush1.bf16.msra.mxu0 0
        %1000 = vmatprep.subr.bf16.mxu0 0
        %1001 = vmatpush1.bf16.msra.mxu0 0
        %1002 = vmatprep.subr.bf16.mxu0 0
        %1003 = vmatpush1.bf16.msra.mxu0 0
        %1004 = vmatprep.subr.bf16.mxu0 0
        %1005 = vmatpush1.bf16.msra.mxu0 0
        %1006 = vmatprep.subr.bf16.mxu0 0
        %1007 = vmatpush1.bf16.msra.mxu0 0
        %1008 = vmatprep.subr.bf16.mxu0 0
        %1009 = vmatpush1.bf16.msra.mxu0 0
        %1010 = vmatprep.subr.bf16.mxu0 0
        %1011 = vmatpush1.bf16.msra.mxu0 0
        %1012 = vmatprep.subr.bf16.mxu0 0
        %1013 = vmatpush1.bf16.msra.mxu0 0
        %1014 = vmatprep.subr.bf16.mxu0 0
        %1015 = vmatpush1.bf16.msra.mxu0 0
        %1016 = vmatprep.subr.bf16.mxu0 0
        %1017 = vmatpush1.bf16.msra.mxu0 0
        %1018 = vmatprep.subr.bf16.mxu0 0
        %1019 = vmatpush1.bf16.msra.mxu0 0
        %1020 = vmatprep.subr.bf16.mxu0 0
        %1021 = vmatpush1.bf16.msra.mxu0 0
        %1022 = vmatprep.mubr.bf16.mxu0 0
        %1023 = vmatmul.mubr.bf16.gmra.mrb[0].mxu0 %v988
        %v1024 = vpop.f32.mrb[0].mxu0
        %v1025 = vadd.f32 %v976, %v1024
        %v1026 = vpop.f32.mrb[0].mxu0
        %v1027 = vpop.f32.mrb[0].mxu0
        %v1028 = vadd.f32 %v980, %v1027
        %v1029 = vpop.f32.mrb[0].mxu0
        %1030 = vdwg.mxu0
        %v1031 = vmax.f32 %v1025, 0.0
        %v1032 = vmax.f32 %v1028, 0.0
        %v1033 = vmul.f32 %v959, %v1031
        %v1034 = vmul.f32 %v959, %v1032
        %v1035 = vadd.f32 %v1033, %v967
        %v1036 = vadd.f32 %v1034, %v967
        %v1037 = vpack.c.bf16 %v1036, %v1035
        %vm1038 = vcmask 130048
        %v1040 = vsel %vm1038, %v438, 0
        %1042 = vmatprep.subr.bf16.mxu0 0
        %1043 = vmatpush1.bf16.msra.mxu0 %v1037
        %1044 = vmatprep.subr.bf16.mxu0 0
        %1045 = vmatpush1.bf16.msra.mxu0 0
        %1046 = vmatprep.subr.bf16.mxu0 0
        %1047 = vmatpush1.bf16.msra.mxu0 0
        %1048 = vmatprep.subr.bf16.mxu0 0
        %1049 = vmatpush1.bf16.msra.mxu0 0
        %1050 = vmatprep.subr.bf16.mxu0 0
        %1051 = vmatpush1.bf16.msra.mxu0 0
        %1052 = vmatprep.subr.bf16.mxu0 0
        %1053 = vmatpush1.bf16.msra.mxu0 0
        %1054 = vmatprep.subr.bf16.mxu0 0
        %1055 = vmatpush1.bf16.msra.mxu0 0
        %1056 = vmatprep.subr.bf16.mxu0 0
        %1057 = vmatpush1.bf16.msra.mxu0 0
        %1058 = vmatprep.subr.bf16.mxu0 0
        %1059 = vmatpush1.bf16.msra.mxu0 0
        %1060 = vmatprep.subr.bf16.mxu0 0
        %1061 = vmatpush1.bf16.msra.mxu0 0
        %1062 = vmatprep.subr.bf16.mxu0 0
        %1063 = vmatpush1.bf16.msra.mxu0 0
        %1064 = vmatprep.subr.bf16.mxu0 0
        %1065 = vmatpush1.bf16.msra.mxu0 0
        %1066 = vmatprep.subr.bf16.mxu0 0
        %1067 = vmatpush1.bf16.msra.mxu0 0
        %1068 = vmatprep.subr.bf16.mxu0 0
        %1069 = vmatpush1.bf16.msra.mxu0 0
        %1070 = vmatprep.subr.bf16.mxu0 0
        %1071 = vmatpush1.bf16.msra.mxu0 0
        %1072 = vmatprep.subr.bf16.mxu0 0
        %1073 = vmatpush1.bf16.msra.mxu0 0
        %1074 = vmatprep.mubr.bf16.mxu0 0
        %1075 = vmatmul.mubr.bf16.gmra.mrb[0].mxu0 %v1040
        %v1076 = vpop.f32.mrb[0].mxu0
        %v1077 = vadd.f32 0.0, %v1076
        %v1078 = vpop.f32.mrb[0].mxu0
        %v1079 = vpop.f32.mrb[0].mxu0
        %v1080 = vpop.f32.mrb[0].mxu0
        %1081 = vdwg.mxu0
        %v1082 = vmul.f32 %v417, %v1077
        %v1083 = vadd.f32 %v1082, %v419
        %v1084 = vlaneseq
        %v1085 = vshrl.u32 %v1084, 7
        %v1086 = vsub.s32 0, %v1085
        %v1087 = vrot.slane %v1083, %v1086
        %v1088 = vpack.c.bf16 %v1087, %v1087
        %v1105 = vunpack.c.l.b16 %v397
        %v1106 = vunpack.c.l.b16 %v398
        %v1107 = vunpack.c.l.b16 %v399
        %v1108 = vunpack.c.l.b16 %v400
        %v1109 = vunpack.c.l.b16 %v401
        %v1110 = vunpack.c.l.b16 %v402
        %v1111 = vunpack.c.l.b16 %v403
        %v1112 = vunpack.c.l.b16 %v404
        %v1113 = vunpack.c.l.b16 %v405
        %v1114 = vunpack.c.l.b16 %v406
        %v1115 = vunpack.c.l.b16 %v407
        %v1116 = vunpack.c.l.b16 %v408
        %v1117 = vunpack.c.l.b16 %v409
        %v1118 = vunpack.c.l.b16 %v410
        %v1119 = vunpack.c.l.b16 %v411
        %v1120 = vunpack.c.l.b16 %v412
        %v1121 = vpack.c.b16 %v1106, %v1105
        %v1122 = vpack.c.b16 %v1108, %v1107
        %v1123 = vpack.c.b16 %v1110, %v1109
        %v1124 = vpack.c.b16 %v1112, %v1111
        %v1125 = vpack.c.b16 %v1114, %v1113
        %v1126 = vpack.c.b16 %v1116, %v1115
        %v1127 = vpack.c.b16 %v1118, %v1117
        %v1128 = vpack.c.b16 %v1120, %v1119
        %1137 = vmatprep.subr.bf16.mxu0 0
        %1138 = vmatpush1.bf16.msra.mxu0 %v1121
        %1139 = vmatprep.subr.bf16.mxu0 0
        %1140 = vmatpush1.bf16.msra.mxu0 %v1122
        %1141 = vmatprep.subr.bf16.mxu0 0
        %1142 = vmatpush1.bf16.msra.mxu0 %v1123
        %1143 = vmatprep.subr.bf16.mxu0 0
        %1144 = vmatpush1.bf16.msra.mxu0 %v1124
        %1145 = vmatprep.subr.bf16.mxu0 0
        %1146 = vmatpush1.bf16.msra.mxu0 %v1125
        %1147 = vmatprep.subr.bf16.mxu0 0
        %1148 = vmatpush1.bf16.msra.mxu0 %v1126
        %1149 = vmatprep.subr.bf16.mxu0 0
        %1150 = vmatpush1.bf16.msra.mxu0 %v1127
        %1151 = vmatprep.subr.bf16.mxu0 0
        %1152 = vmatpush1.bf16.msra.mxu0 %v1128
        %1153 = vmatprep.subr.bf16.mxu0 0
        %1154 = vmatpush1.bf16.msra.mxu0 0
        %1155 = vmatprep.subr.bf16.mxu0 0
        %1156 = vmatpush1.bf16.msra.mxu0 0
        %1157 = vmatprep.subr.bf16.mxu0 0
        %1158 = vmatpush1.bf16.msra.mxu0 0
        %1159 = vmatprep.subr.bf16.mxu0 0
        %1160 = vmatpush1.bf16.msra.mxu0 0
        %1161 = vmatprep.subr.bf16.mxu0 0
        %1162 = vmatpush1.bf16.msra.mxu0 0
        %1163 = vmatprep.subr.bf16.mxu0 0
        %1164 = vmatpush1.bf16.msra.mxu0 0
        %1165 = vmatprep.subr.bf16.mxu0 0
        %1166 = vmatpush1.bf16.msra.mxu0 0
        %1167 = vmatprep.subr.bf16.mxu0 0
        %1168 = vmatpush1.bf16.msra.mxu0 0
        %1169 = vmatprep.mubr.bf16.mxu0 0
        %1170 = vmatmul.mubr.bf16.gmra.mrb[0].mxu0 %v1088
        %v1171 = vpop.f32.mrb[0].mxu0
        %v1172 = vadd.f32 0.0, %v1171
        %v1173 = vpop.f32.mrb[0].mxu0
        %v1174 = vpop.f32.mrb[0].mxu0
        %v1175 = vpop.f32.mrb[0].mxu0
        %1176 = vdwg.mxu0
        %1177 = vst [vmem:[%s379] sm:$0xff] %v1172
        %s1178 = sand.u32 %s175, 1
        %s1179 = scalar_lea.sflag [#allocation5], %s1178
        %s1180 = sand.u32 %s175, 1
        %s1181 = smul.addr %s1180, 8
        %s1182 = scalar_lea.vmem [#allocation8], %s1181
        // Predicated region
        $region94: #{tpu_custom_call.1} parent=80 // pred_check
          %p1183 = pneg %p185
        $region95: #{tpu_custom_call.1} parent=80 // pred_check_branch
          %1185 = sbr.rel (%p1183) target = $region97
        $region96: #{tpu_custom_call.1} parent=80 // pred_region
          %s1187 = ssub.s32 128, 128
          %1188 = vsyncadd %s1179, %s1187
          %s1189 = smul.addr %s26, 128
          %s1190 = scalar_lea.hbm %s6, %s1189
          %s1192 = sshll.u32 %s1182, 4
          %s1193 = int_to_ptr.vmem [resolvable:$true] %s1192
          %1195 = dma.vmem_to_hbm [thread:$0]  %s1193, 128, %s1190, %s1179
        $region97: #{tpu_custom_call.1} parent=80 // pred_fallthru
          _
      $region81: #{tpu_custom_call.1} parent=5 // pred_fallthru
        _
      %p1196 = scmp.le.s32.totalorder 2, %s21
      // Predicated region
      $region98: #{tpu_custom_call.1} parent=5 // pred_check
        %p1197 = pneg %p1196
      $region99: #{tpu_custom_call.1} parent=5 // pred_check_branch
        %1199 = sbr.rel (%p1197) target = $region101
      $region100: #{tpu_custom_call.1} parent=5 // pred_region
        %s1200 = ssub.s32 %s21, 2
        // Predicated region
        $region102: #{tpu_custom_call.1} parent=100 // pred_check
          %p1201 = pneg %p191
        $region103: #{tpu_custom_call.1} parent=100 // pred_check_branch
          %1203 = sbr.rel (%p1201) target = $region105
        $region104: #{tpu_custom_call.1} parent=100 // pred_region
          %s1204 = sand.u32 %s176, 1
          %s1205 = scalar_lea.sflag [#allocation5], %s1204
          %s1206 = sand.u32 %s176, 1
          %s1207 = smul.addr %s1206, 8
          %s1208 = scalar_lea.vmem [#allocation8], %s1207
          %1209 = dma.done %s1205, 128
        $region105: #{tpu_custom_call.1} parent=100 // pred_fallthru
          _
      $region101: #{tpu_custom_call.1} parent=5 // pred_fallthru
        _
    $region6: #{tpu_custom_call.1} parent=1 // loop_footer
      %s25 = sadd.s32 1, %s21
    $region7: #{tpu_custom_call.1} parent=1 // loop_footer_branch
      %20 = sbr.rel target = $region3
    $region8: #{tpu_custom_call.1} parent=1 // loop_exit
      _
    %1210 = vsyncpa [#allocation4], 1
    %s1211 = scalar_lea.sflag [#allocation4], 1
    %1212 = vsyncpa %s1211, 1
    %1213 = vsyncpa [#allocation7], 1
    %s1214 = scalar_lea.sflag [#allocation7], 1
    %1215 = vsyncpa %s1214, 1
    %1216 = vsyncpa [#allocation5], 1
    %s1217 = scalar_lea.sflag [#allocation5], 1
    %1218 = vsyncpa %s1217, 1

</llo_original>
